<compile_context>
chip_gen: v5e
topology: v5e:2x2
jax: 0.10.0
libtpu: 0.0.40
codegen_flags: <defaults>
</compile_context>

<pallas_src>
import math

import jax
import jax.numpy as jnp
import numpy as np
from jax.experimental import pallas as pl
from jax.experimental.pallas import tpu as pltpu


def _round_up(x, m):
    return (x + m - 1) // m * m


def _lstm_kernel(x_ref, wx_ref, wh_ref, b_ref, out_ref, h_scr, c_scr, gx_scr):
    """x_ref: (TT, TB, I) input block (matmul_dtype).
    wx_ref: (I, 4H), wh_ref: (H, 4H) resident weights (matmul_dtype), gate order
    [i, f, o, g].  b_ref: (1, 4H) f32 bias.  out_ref: (TT, TB, H).
    h_scr/c_scr: (TB, H) f32 carries persisting across time blocks.
    gx_scr: (TT, TB, 4H) f32 input-projection scratch."""
    H = h_scr.shape[-1]
    H4 = gx_scr.shape[-1]
    TT = x_ref.shape[0]
    TB = x_ref.shape[1]

    @pl.when(pl.program_id(1) == 0)       # first time-block of this batch block
    def _():
        h_scr[...] = jnp.zeros_like(h_scr)
        c_scr[...] = jnp.zeros_like(c_scr)

    # Hoisted resident-operand loads / broadcast (once per grid step, not per t).
    wx = wx_ref[...]
    wh = wh_ref[...]
    bias = jnp.broadcast_to(b_ref[...], (TB, H4))

    unroll = min(TT, 8)

    # Prologue: fused input projection for the whole time block (off the serial
    # recurrence path), f32 accumulation into VMEM scratch.
    def proj(t, carry):
        gx_scr[t] = jnp.dot(x_ref[t], wx,
                            preferred_element_type=jnp.float32) + bias
        return carry

    jax.lax.fori_loop(0, TT, proj, 0, unroll=unroll)

    # Serial recurrence over the time block.
    def step(t, carry):
        h, c = carry                                         # f32 (TB, H)
        gates = gx_scr[t] + jnp.dot(h.astype(wh.dtype), wh,
                                    preferred_element_type=jnp.float32)
        # gate order [i, f, o, g]; sigmoid via a single tanh pass on the EUP.
        sig = jnp.tanh(gates[:, : 3 * H] * 0.5) * 0.5 + 0.5
        g_g = jnp.tanh(gates[:, 3 * H:])
        i_g = sig[:, 0 * H:1 * H]
        f_g = sig[:, 1 * H:2 * H]
        o_g = sig[:, 2 * H:3 * H]
        c_new = c * f_g + i_g * g_g
        h_new = o_g * jnp.tanh(c_new)
        out_ref[t] = h_new.astype(out_ref.dtype)
        return h_new, c_new

    h, c = jax.lax.fori_loop(0, TT, step, (h_scr[...], c_scr[...]), unroll=unroll)
    h_scr[...] = h
    c_scr[...] = c


def _vmem_bytes(TT, TB, I, H, in_bytes, out_bytes):
    """Conservative VMEM footprint estimate for one grid step (double buffers)."""
    H4 = 4 * H
    x_blk = 2 * TT * TB * I * in_bytes          # double-buffered x stream
    out_blk = 2 * TT * TB * H * out_bytes       # double-buffered output stream
    weights = 2 * (I * H4 + H * H4) * in_bytes + 2 * H4 * 4
    scratch = (2 * TB * H + TT * TB * H4) * 4   # h/c carries + gx scratch (f32)
    return x_blk + out_blk + weights + scratch


def _vmem_capacity():
    try:
        return int(pltpu.get_tpu_info().vmem_capacity_bytes)
    except Exception:
        return 64 * 1024 * 1024                 # conservative (v7x per-TC)


def _choose_blocks(T, B, I, H, time_block, batch_block, in_bytes, out_bytes, budget):
    # Batch block: multiple of 8 sublanes; ensure >=2 blocks when batch is big
    # enough so v7x's second TensorCore gets work (no effect on v5e/v6e).
    TB = min(batch_block, _round_up(B, 8))
    Bp = _round_up(B, TB)
    if Bp // TB == 1 and Bp >= 16:
        TB = _round_up((Bp + 1) // 2, 8)
        Bp = _round_up(B, TB)
    TT = max(1, min(time_block, T))
    # Shrink TT first, then TB, until the footprint fits this chip's VMEM budget.
    while _vmem_bytes(TT, TB, I, H, in_bytes, out_bytes) > budget and TT > 1:
        TT = max(1, TT // 2)
    while _vmem_bytes(TT, TB, I, H, in_bytes, out_bytes) > budget and TB > 8:
        TB = max(8, _round_up(TB // 2, 8))
        Bp = _round_up(B, TB)
    # Prefer a time block dividing T so no padded (wasted) timesteps are computed.
    for cand in range(TT, 0, -1):
        if T % cand == 0:
            if cand >= max(1, TT // 4):
                TT = cand
            break
    Tp = _round_up(T, TT)
    return TT, Tp, TB, Bp


def lstm_forward(x, w_x2h, w_h2h, b_x2h, b_h2h, *,
                 matmul_dtype=jnp.bfloat16, out_dtype=jnp.float32,
                 time_block=16, batch_block=128):
    """x: (T, B, I) f32 (seq-major, batch_first=False).
    Weights in PyTorch nn.Linear layout: w_x2h (4H, I), w_h2h (4H, H),
    biases (4H,), gate order [i, f, g, o].  Zero initial hidden/cell state.
    Returns outs: (T, B, H) in out_dtype."""
    T, B, I = x.shape
    H = w_h2h.shape[1]
    H4 = 4 * H
    assert H % 8 == 0, "hidden_size must be a multiple of 8 (sublane tiling)"

    # Gate-column permutation [i, f, g, o] -> [i, f, o, g] (sigmoid gates contiguous).
    perm = np.concatenate([np.arange(0, 2 * H),
                           np.arange(3 * H, 4 * H),
                           np.arange(2 * H, 3 * H)])
    wx_t = jnp.transpose(w_x2h[perm, :]).astype(matmul_dtype)          # (I, 4H)
    wh_t = jnp.transpose(w_h2h[perm, :]).astype(matmul_dtype)          # (H, 4H)
    bias = (b_x2h + b_h2h)[perm].astype(jnp.float32).reshape(1, H4)    # (1, 4H)

    in_bytes = jnp.dtype(matmul_dtype).itemsize
    out_bytes = jnp.dtype(out_dtype).itemsize

    vmem_cap = _vmem_capacity()
    budget = int(0.7 * vmem_cap)
    TT, Tp, TB, Bp = _choose_blocks(T, B, I, H, time_block, batch_block,
                                    in_bytes, out_bytes, budget)
    nb, nt = Bp // TB, Tp // TT

    x_p = jnp.pad(x.astype(matmul_dtype), ((0, Tp - T), (0, Bp - B), (0, 0)))

    needed = _vmem_bytes(TT, TB, I, H, in_bytes, out_bytes)
    vmem_limit = int(min(vmem_cap, max(needed + (8 << 20), 32 << 20)))

    out = pl.pallas_call(
        _lstm_kernel,
        out_shape=jax.ShapeDtypeStruct((Tp, Bp, H), out_dtype),
        grid_spec=pltpu.PrefetchScalarGridSpec(
            num_scalar_prefetch=0,
            grid=(nb, nt),                                        # (batch, time)
            in_specs=[
                pl.BlockSpec((TT, TB, I), lambda b, t: (t, b, 0)),    # x stream
                pl.BlockSpec((I, H4), lambda b, t: (0, 0)),           # Wx resident
                pl.BlockSpec((H, H4), lambda b, t: (0, 0)),           # Wh resident
                pl.BlockSpec((1, H4), lambda b, t: (0, 0)),           # bias resident
            ],
            out_specs=pl.BlockSpec((TT, TB, H), lambda b, t: (t, b, 0)),
            scratch_shapes=[
                pltpu.VMEM((TB, H), jnp.float32),       # h carry
                pltpu.VMEM((TB, H), jnp.float32),       # c carry
                pltpu.VMEM((TT, TB, H4), jnp.float32),  # fused input projection
            ],
        ),
        compiler_params=pltpu.CompilerParams(
            # batch blocks are independent (megacore); time must run in order.
            dimension_semantics=("parallel", "arbitrary"),
            vmem_limit_bytes=vmem_limit,
        ),
    )(x_p, wx_t, wh_t, bias)

    return out[:T, :B, :]
    # TODO(synk): bidirectional=True branch of the original module (reverse-time
    # pass + concat) is not implemented; the module's default is unidirectional.


def lstm_reference(x, w_x2h, w_h2h, b_x2h, b_h2h):
    """Pure-JAX f32 reference mirroring the PyTorch LSTMCell loop exactly
    (gate order [i, f, g, o], zero initial state)."""
    T, B, I = x.shape
    H = w_h2h.shape[1]
    wx_t = w_x2h.T
    wh_t = w_h2h.T
    bias = b_x2h + b_h2h

    def step(carry, x_t):
        h, c = carry
        gates = x_t @ wx_t + h @ wh_t + bias
        i = jax.nn.sigmoid(gates[:, 0 * H:1 * H])
        f = jax.nn.sigmoid(gates[:, 1 * H:2 * H])
        g = jnp.tanh(gates[:, 2 * H:3 * H])
        o = jax.nn.sigmoid(gates[:, 3 * H:4 * H])
        c_new = c * f + i * g
        h_new = o * jnp.tanh(c_new)
        return (h_new, c_new), h_new

    h0 = jnp.zeros((B, H), jnp.float32)
    c0 = jnp.zeros((B, H), jnp.float32)
    _, outs = jax.lax.scan(step, (h0, c0), x)
    return outs


if __name__ == "__main__":
    # Small shapes: seq=8, batch=4, input_size=16, hidden_size=32
    T, B, I, H = 8, 4, 16, 32

    key = jax.random.PRNGKey(0)
    k_x, k_wx, k_wh, k_bx, k_bh = jax.random.split(key, 5)

    # PyTorch reset_parameters: uniform(-std, std), std = 1/sqrt(hidden_size)
    std = 1.0 / math.sqrt(H)
    w_x2h = jax.random.uniform(k_wx, (4 * H, I), jnp.float32, -std, std)
    w_h2h = jax.random.uniform(k_wh, (4 * H, H), jnp.float32, -std, std)
    b_x2h = jax.random.uniform(k_bx, (4 * H,), jnp.float32, -std, std)
    b_h2h = jax.random.uniform(k_bh, (4 * H,), jnp.float32, -std, std)

    x = jax.random.normal(k_x, (T, B, I), jnp.float32)

    ref = jax.block_until_ready(lstm_reference(x, w_x2h, w_h2h, b_x2h, b_h2h))

    # 1) f32 path (all matmuls f32): must match the PyTorch-semantics reference.
    #    time_block=4 -> two time grid steps, exercising the cross-block h/c carry.
    out_f32 = jax.block_until_ready(
        lstm_forward(x, w_x2h, w_h2h, b_x2h, b_h2h,
                     matmul_dtype=jnp.float32, time_block=4))
    np.testing.assert_allclose(np.asarray(out_f32), np.asarray(ref),
                               rtol=5e-4, atol=5e-5)

    # 2) bf16 streaming/matmul path (MXU fast path), f32 accumulate/carries.
    out_bf16 = jax.block_until_ready(
        lstm_forward(x, w_x2h, w_h2h, b_x2h, b_h2h,
                     matmul_dtype=jnp.bfloat16, time_block=4))
    np.testing.assert_allclose(np.asarray(out_bf16), np.asarray(ref),
                               rtol=3e-2, atol=3e-2)

    print("KERNEL_OK")
</pallas_src>

<mosaic_0001>
module attributes {stable_mosaic.version = 11 : i64} {
  func.func @_lstm_kernel(%arg0: i32, %arg1: i32, %arg2: memref<4x8x16xf32, #tpu.memory_space<vmem>>, %arg3: memref<16x128xf32, #tpu.memory_space<vmem>>, %arg4: memref<32x128xf32, #tpu.memory_space<vmem>>, %arg5: memref<1x128xf32, #tpu.memory_space<vmem>>, %arg6: memref<4x8x32xf32, #tpu.memory_space<vmem>>, %arg7: memref<8x32xf32, #tpu.memory_space<vmem>>, %arg8: memref<8x32xf32, #tpu.memory_space<vmem>>, %arg9: memref<4x8x128xf32, #tpu.memory_space<vmem>>) attributes {dimension_semantics = [#tpu.dimension_semantics<parallel>, #tpu.dimension_semantics<arbitrary>], iteration_bounds = array<i64: 1, 2>, scalar_prefetch = 0 : i64, scratch_operands = 3 : i64, tpu.core_type = #tpu.core_type<tc>, window_params = [{transform_indices = @transform_0, window_bounds = array<i64: 4, 8, 16>}, {pipeline_mode = #tpu.pipeline_mode<synchronous>, transform_indices = @transform_1, window_bounds = array<i64: 16, 128>}, {pipeline_mode = #tpu.pipeline_mode<synchronous>, transform_indices = @transform_2, window_bounds = array<i64: 32, 128>}, {pipeline_mode = #tpu.pipeline_mode<synchronous>, transform_indices = @transform_3, window_bounds = array<i64: 1, 128>}, {transform_indices = @transform_4, window_bounds = array<i64: 4, 8, 32>}]} {
    %c0_i32 = arith.constant 0 : i32
    %0 = arith.cmpi eq, %arg1, %c0_i32 : i32
    %1 = arith.extui %0 : i1 to i32
    %c0_i32_0 = arith.constant 0 : i32
    %2 = arith.cmpi ne, %1, %c0_i32_0 : i32
    scf.if %2 {
      %cst_71 = arith.constant 0.000000e+00 : f32
      %156 = vector.broadcast %cst_71 : f32 to vector<8x32xf32>
      %c0_72 = arith.constant 0 : index
      %c0_73 = arith.constant 0 : index
      %157 = vector.load %arg7[%c0_72, %c0_73] : memref<8x32xf32, #tpu.memory_space<vmem>>, vector<8x32xf32>
      tpu.vector_store %arg7[%c0_72, %c0_73], %156 {strides = array<i32>} : memref<8x32xf32, #tpu.memory_space<vmem>>, vector<8x32xf32>,
      %cst_74 = arith.constant 0.000000e+00 : f32
      %158 = vector.broadcast %cst_74 : f32 to vector<8x32xf32>
      %c0_75 = arith.constant 0 : index
      %c0_76 = arith.constant 0 : index
      %159 = vector.load %arg8[%c0_75, %c0_76] : memref<8x32xf32, #tpu.memory_space<vmem>>, vector<8x32xf32>
      tpu.vector_store %arg8[%c0_75, %c0_76], %158 {strides = array<i32>} : memref<8x32xf32, #tpu.memory_space<vmem>>, vector<8x32xf32>,
    } else {
    }
    %c0 = arith.constant 0 : index
    %c0_1 = arith.constant 0 : index
    %3 = vector.load %arg3[%c0, %c0_1] : memref<16x128xf32, #tpu.memory_space<vmem>>, vector<16x128xf32>
    %c0_2 = arith.constant 0 : index
    %c0_3 = arith.constant 0 : index
    %4 = vector.load %arg4[%c0_2, %c0_3] : memref<32x128xf32, #tpu.memory_space<vmem>>, vector<32x128xf32>
    %c0_4 = arith.constant 0 : index
    %c0_5 = arith.constant 0 : index
    %5 = vector.load %arg5[%c0_4, %c0_5] : memref<1x128xf32, #tpu.memory_space<vmem>>, vector<1x128xf32>
    %6 = vector.shape_cast %5 : vector<1x128xf32> to vector<1x128xf32>
    %7 = vector.broadcast %6 : vector<1x128xf32> to vector<8x128xf32>
    %c0_i32_6 = arith.constant 0 : i32
    %8 = arith.index_cast %c0_i32_6 : i32 to index
    %c0_7 = arith.constant 0 : index
    %c0_8 = arith.constant 0 : index
    %9 = vector.load %arg2[%8, %c0_7, %c0_8] : memref<4x8x16xf32, #tpu.memory_space<vmem>>, vector<1x8x16xf32>
    %10 = vector.shape_cast %9 : vector<1x8x16xf32> to vector<8x16xf32>
    %cst = arith.constant dense<0.000000e+00> : vector<8x128xf32>
    %11 = tpu.matmul %10, %3, %cst {dimension_numbers = #tpu.dot_dimension_numbers<[1], [0], [0], [1], [0, 0, 1, 1], [], []>} : vector<8x16xf32>, vector<16x128xf32>, vector<8x128xf32> -> vector<8x128xf32>
    %12 = arith.addf %11, %7 : vector<8x128xf32>
    %13 = arith.index_cast %c0_i32_6 : i32 to index
    %c0_9 = arith.constant 0 : index
    %c0_10 = arith.constant 0 : index
    %14 = vector.load %arg9[%13, %c0_9, %c0_10] : memref<4x8x128xf32, #tpu.memory_space<vmem>>, vector<1x8x128xf32>
    %15 = vector.shape_cast %14 : vector<1x8x128xf32> to vector<8x128xf32>
    %16 = vector.shape_cast %12 : vector<8x128xf32> to vector<1x8x128xf32>
    tpu.vector_store %arg9[%13, %c0_9, %c0_10], %16 {strides = array<i32>} : memref<4x8x128xf32, #tpu.memory_space<vmem>>, vector<1x8x128xf32>,
    %c1_i32 = arith.constant 1 : i32
    %17 = arith.index_cast %c1_i32 : i32 to index
    %c0_11 = arith.constant 0 : index
    %c0_12 = arith.constant 0 : index
    %18 = vector.load %arg2[%17, %c0_11, %c0_12] : memref<4x8x16xf32, #tpu.memory_space<vmem>>, vector<1x8x16xf32>
    %19 = vector.shape_cast %18 : vector<1x8x16xf32> to vector<8x16xf32>
    %cst_13 = arith.constant dense<0.000000e+00> : vector<8x128xf32>
    %20 = tpu.matmul %19, %3, %cst_13 {dimension_numbers = #tpu.dot_dimension_numbers<[1], [0], [0], [1], [0, 0, 1, 1], [], []>} : vector<8x16xf32>, vector<16x128xf32>, vector<8x128xf32> -> vector<8x128xf32>
    %21 = arith.addf %20, %7 : vector<8x128xf32>
    %22 = arith.index_cast %c1_i32 : i32 to index
    %c0_14 = arith.constant 0 : index
    %c0_15 = arith.constant 0 : index
    %23 = vector.load %arg9[%22, %c0_14, %c0_15] : memref<4x8x128xf32, #tpu.memory_space<vmem>>, vector<1x8x128xf32>
    %24 = vector.shape_cast %23 : vector<1x8x128xf32> to vector<8x128xf32>
    %25 = vector.shape_cast %21 : vector<8x128xf32> to vector<1x8x128xf32>
    tpu.vector_store %arg9[%22, %c0_14, %c0_15], %25 {strides = array<i32>} : memref<4x8x128xf32, #tpu.memory_space<vmem>>, vector<1x8x128xf32>,
    %c2_i32 = arith.constant 2 : i32
    %26 = arith.index_cast %c2_i32 : i32 to index
    %c0_16 = arith.constant 0 : index
    %c0_17 = arith.constant 0 : index
    %27 = vector.load %arg2[%26, %c0_16, %c0_17] : memref<4x8x16xf32, #tpu.memory_space<vmem>>, vector<1x8x16xf32>
    %28 = vector.shape_cast %27 : vector<1x8x16xf32> to vector<8x16xf32>
    %cst_18 = arith.constant dense<0.000000e+00> : vector<8x128xf32>
    %29 = tpu.matmul %28, %3, %cst_18 {dimension_numbers = #tpu.dot_dimension_numbers<[1], [0], [0], [1], [0, 0, 1, 1], [], []>} : vector<8x16xf32>, vector<16x128xf32>, vector<8x128xf32> -> vector<8x128xf32>
    %30 = arith.addf %29, %7 : vector<8x128xf32>
    %31 = arith.index_cast %c2_i32 : i32 to index
    %c0_19 = arith.constant 0 : index
    %c0_20 = arith.constant 0 : index
    %32 = vector.load %arg9[%31, %c0_19, %c0_20] : memref<4x8x128xf32, #tpu.memory_space<vmem>>, vector<1x8x128xf32>
    %33 = vector.shape_cast %32 : vector<1x8x128xf32> to vector<8x128xf32>
    %34 = vector.shape_cast %30 : vector<8x128xf32> to vector<1x8x128xf32>
    tpu.vector_store %arg9[%31, %c0_19, %c0_20], %34 {strides = array<i32>} : memref<4x8x128xf32, #tpu.memory_space<vmem>>, vector<1x8x128xf32>,
    %c3_i32 = arith.constant 3 : i32
    %35 = arith.index_cast %c3_i32 : i32 to index
    %c0_21 = arith.constant 0 : index
    %c0_22 = arith.constant 0 : index
    %36 = vector.load %arg2[%35, %c0_21, %c0_22] : memref<4x8x16xf32, #tpu.memory_space<vmem>>, vector<1x8x16xf32>
    %37 = vector.shape_cast %36 : vector<1x8x16xf32> to vector<8x16xf32>
    %cst_23 = arith.constant dense<0.000000e+00> : vector<8x128xf32>
    %38 = tpu.matmul %37, %3, %cst_23 {dimension_numbers = #tpu.dot_dimension_numbers<[1], [0], [0], [1], [0, 0, 1, 1], [], []>} : vector<8x16xf32>, vector<16x128xf32>, vector<8x128xf32> -> vector<8x128xf32>
    %39 = arith.addf %38, %7 : vector<8x128xf32>
    %40 = arith.index_cast %c3_i32 : i32 to index
    %c0_24 = arith.constant 0 : index
    %c0_25 = arith.constant 0 : index
    %41 = vector.load %arg9[%40, %c0_24, %c0_25] : memref<4x8x128xf32, #tpu.memory_space<vmem>>, vector<1x8x128xf32>
    %42 = vector.shape_cast %41 : vector<1x8x128xf32> to vector<8x128xf32>
    %43 = vector.shape_cast %39 : vector<8x128xf32> to vector<1x8x128xf32>
    tpu.vector_store %arg9[%40, %c0_24, %c0_25], %43 {strides = array<i32>} : memref<4x8x128xf32, #tpu.memory_space<vmem>>, vector<1x8x128xf32>,
    %c4_i32 = arith.constant 4 : i32
    %c0_26 = arith.constant 0 : index
    %c0_27 = arith.constant 0 : index
    %44 = vector.load %arg7[%c0_26, %c0_27] : memref<8x32xf32, #tpu.memory_space<vmem>>, vector<8x32xf32>
    %c0_28 = arith.constant 0 : index
    %c0_29 = arith.constant 0 : index
    %45 = vector.load %arg8[%c0_28, %c0_29] : memref<8x32xf32, #tpu.memory_space<vmem>>, vector<8x32xf32>
    %c0_i32_30 = arith.constant 0 : i32
    %46 = arith.index_cast %c0_i32_30 : i32 to index
    %c0_31 = arith.constant 0 : index
    %c0_32 = arith.constant 0 : index
    %47 = vector.load %arg9[%46, %c0_31, %c0_32] : memref<4x8x128xf32, #tpu.memory_space<vmem>>, vector<1x8x128xf32>
    %48 = vector.shape_cast %47 : vector<1x8x128xf32> to vector<8x128xf32>
    %cst_33 = arith.constant dense<0.000000e+00> : vector<8x128xf32>
    %49 = tpu.matmul %44, %4, %cst_33 {dimension_numbers = #tpu.dot_dimension_numbers<[1], [0], [0], [1], [0, 0, 1, 1], [], []>} : vector<8x32xf32>, vector<32x128xf32>, vector<8x128xf32> -> vector<8x128xf32>
    %50 = arith.addf %48, %49 : vector<8x128xf32>
    %51 = vector.extract_strided_slice %50 {offsets = [0, 0], sizes = [8, 96], strides = [1, 1]} : vector<8x128xf32> to vector<8x96xf32>
    %cst_34 = arith.constant 5.000000e-01 : f32
    %52 = vector.broadcast %cst_34 : f32 to vector<8x96xf32>
    %53 = arith.mulf %51, %52 : vector<8x96xf32>
    %54 = math.tanh %53 : vector<8x96xf32>
    %cst_35 = arith.constant 5.000000e-01 : f32
    %55 = vector.broadcast %cst_35 : f32 to vector<8x96xf32>
    %56 = arith.mulf %54, %55 : vector<8x96xf32>
    %cst_36 = arith.constant 5.000000e-01 : f32
    %57 = vector.broadcast %cst_36 : f32 to vector<8x96xf32>
    %58 = arith.addf %56, %57 : vector<8x96xf32>
    %59 = vector.extract_strided_slice %50 {offsets = [0, 96], sizes = [8, 32], strides = [1, 1]} : vector<8x128xf32> to vector<8x32xf32>
    %60 = math.tanh %59 : vector<8x32xf32>
    %61 = vector.extract_strided_slice %58 {offsets = [0, 0], sizes = [8, 32], strides = [1, 1]} : vector<8x96xf32> to vector<8x32xf32>
    %62 = vector.extract_strided_slice %58 {offsets = [0, 32], sizes = [8, 32], strides = [1, 1]} : vector<8x96xf32> to vector<8x32xf32>
    %63 = vector.extract_strided_slice %58 {offsets = [0, 64], sizes = [8, 32], strides = [1, 1]} : vector<8x96xf32> to vector<8x32xf32>
    %64 = arith.mulf %45, %62 : vector<8x32xf32>
    %65 = arith.mulf %61, %60 : vector<8x32xf32>
    %66 = arith.addf %64, %65 : vector<8x32xf32>
    %67 = math.tanh %66 : vector<8x32xf32>
    %68 = arith.mulf %63, %67 : vector<8x32xf32>
    %69 = arith.index_cast %c0_i32_30 : i32 to index
    %c0_37 = arith.constant 0 : index
    %c0_38 = arith.constant 0 : index
    %70 = vector.load %arg6[%69, %c0_37, %c0_38] : memref<4x8x32xf32, #tpu.memory_space<vmem>>, vector<1x8x32xf32>
    %71 = vector.shape_cast %70 : vector<1x8x32xf32> to vector<8x32xf32>
    %72 = vector.shape_cast %68 : vector<8x32xf32> to vector<1x8x32xf32>
    tpu.vector_store %arg6[%69, %c0_37, %c0_38], %72 {strides = array<i32>} : memref<4x8x32xf32, #tpu.memory_space<vmem>>, vector<1x8x32xf32>,
    %c1_i32_39 = arith.constant 1 : i32
    %73 = arith.index_cast %c1_i32_39 : i32 to index
    %c0_40 = arith.constant 0 : index
    %c0_41 = arith.constant 0 : index
    %74 = vector.load %arg9[%73, %c0_40, %c0_41] : memref<4x8x128xf32, #tpu.memory_space<vmem>>, vector<1x8x128xf32>
    %75 = vector.shape_cast %74 : vector<1x8x128xf32> to vector<8x128xf32>
    %cst_42 = arith.constant dense<0.000000e+00> : vector<8x128xf32>
    %76 = tpu.matmul %68, %4, %cst_42 {dimension_numbers = #tpu.dot_dimension_numbers<[1], [0], [0], [1], [0, 0, 1, 1], [], []>} : vector<8x32xf32>, vector<32x128xf32>, vector<8x128xf32> -> vector<8x128xf32>
    %77 = arith.addf %75, %76 : vector<8x128xf32>
    %78 = vector.extract_strided_slice %77 {offsets = [0, 0], sizes = [8, 96], strides = [1, 1]} : vector<8x128xf32> to vector<8x96xf32>
    %cst_43 = arith.constant 5.000000e-01 : f32
    %79 = vector.broadcast %cst_43 : f32 to vector<8x96xf32>
    %80 = arith.mulf %78, %79 : vector<8x96xf32>
    %81 = math.tanh %80 : vector<8x96xf32>
    %cst_44 = arith.constant 5.000000e-01 : f32
    %82 = vector.broadcast %cst_44 : f32 to vector<8x96xf32>
    %83 = arith.mulf %81, %82 : vector<8x96xf32>
    %cst_45 = arith.constant 5.000000e-01 : f32
    %84 = vector.broadcast %cst_45 : f32 to vector<8x96xf32>
    %85 = arith.addf %83, %84 : vector<8x96xf32>
    %86 = vector.extract_strided_slice %77 {offsets = [0, 96], sizes = [8, 32], strides = [1, 1]} : vector<8x128xf32> to vector<8x32xf32>
    %87 = math.tanh %86 : vector<8x32xf32>
    %88 = vector.extract_strided_slice %85 {offsets = [0, 0], sizes = [8, 32], strides = [1, 1]} : vector<8x96xf32> to vector<8x32xf32>
    %89 = vector.extract_strided_slice %85 {offsets = [0, 32], sizes = [8, 32], strides = [1, 1]} : vector<8x96xf32> to vector<8x32xf32>
    %90 = vector.extract_strided_slice %85 {offsets = [0, 64], sizes = [8, 32], strides = [1, 1]} : vector<8x96xf32> to vector<8x32xf32>
    %91 = arith.mulf %66, %89 : vector<8x32xf32>
    %92 = arith.mulf %88, %87 : vector<8x32xf32>
    %93 = arith.addf %91, %92 : vector<8x32xf32>
    %94 = math.tanh %93 : vector<8x32xf32>
    %95 = arith.mulf %90, %94 : vector<8x32xf32>
    %96 = arith.index_cast %c1_i32_39 : i32 to index
    %c0_46 = arith.constant 0 : index
    %c0_47 = arith.constant 0 : index
    %97 = vector.load %arg6[%96, %c0_46, %c0_47] : memref<4x8x32xf32, #tpu.memory_space<vmem>>, vector<1x8x32xf32>
    %98 = vector.shape_cast %97 : vector<1x8x32xf32> to vector<8x32xf32>
    %99 = vector.shape_cast %95 : vector<8x32xf32> to vector<1x8x32xf32>
    tpu.vector_store %arg6[%96, %c0_46, %c0_47], %99 {strides = array<i32>} : memref<4x8x32xf32, #tpu.memory_space<vmem>>, vector<1x8x32xf32>,
    %c2_i32_48 = arith.constant 2 : i32
    %100 = arith.index_cast %c2_i32_48 : i32 to index
    %c0_49 = arith.constant 0 : index
    %c0_50 = arith.constant 0 : index
    %101 = vector.load %arg9[%100, %c0_49, %c0_50] : memref<4x8x128xf32, #tpu.memory_space<vmem>>, vector<1x8x128xf32>
    %102 = vector.shape_cast %101 : vector<1x8x128xf32> to vector<8x128xf32>
    %cst_51 = arith.constant dense<0.000000e+00> : vector<8x128xf32>
    %103 = tpu.matmul %95, %4, %cst_51 {dimension_numbers = #tpu.dot_dimension_numbers<[1], [0], [0], [1], [0, 0, 1, 1], [], []>} : vector<8x32xf32>, vector<32x128xf32>, vector<8x128xf32> -> vector<8x128xf32>
    %104 = arith.addf %102, %103 : vector<8x128xf32>
    %105 = vector.extract_strided_slice %104 {offsets = [0, 0], sizes = [8, 96], strides = [1, 1]} : vector<8x128xf32> to vector<8x96xf32>
    %cst_52 = arith.constant 5.000000e-01 : f32
    %106 = vector.broadcast %cst_52 : f32 to vector<8x96xf32>
    %107 = arith.mulf %105, %106 : vector<8x96xf32>
    %108 = math.tanh %107 : vector<8x96xf32>
    %cst_53 = arith.constant 5.000000e-01 : f32
    %109 = vector.broadcast %cst_53 : f32 to vector<8x96xf32>
    %110 = arith.mulf %108, %109 : vector<8x96xf32>
    %cst_54 = arith.constant 5.000000e-01 : f32
    %111 = vector.broadcast %cst_54 : f32 to vector<8x96xf32>
    %112 = arith.addf %110, %111 : vector<8x96xf32>
    %113 = vector.extract_strided_slice %104 {offsets = [0, 96], sizes = [8, 32], strides = [1, 1]} : vector<8x128xf32> to vector<8x32xf32>
    %114 = math.tanh %113 : vector<8x32xf32>
    %115 = vector.extract_strided_slice %112 {offsets = [0, 0], sizes = [8, 32], strides = [1, 1]} : vector<8x96xf32> to vector<8x32xf32>
    %116 = vector.extract_strided_slice %112 {offsets = [0, 32], sizes = [8, 32], strides = [1, 1]} : vector<8x96xf32> to vector<8x32xf32>
    %117 = vector.extract_strided_slice %112 {offsets = [0, 64], sizes = [8, 32], strides = [1, 1]} : vector<8x96xf32> to vector<8x32xf32>
    %118 = arith.mulf %93, %116 : vector<8x32xf32>
    %119 = arith.mulf %115, %114 : vector<8x32xf32>
    %120 = arith.addf %118, %119 : vector<8x32xf32>
    %121 = math.tanh %120 : vector<8x32xf32>
    %122 = arith.mulf %117, %121 : vector<8x32xf32>
    %123 = arith.index_cast %c2_i32_48 : i32 to index
    %c0_55 = arith.constant 0 : index
    %c0_56 = arith.constant 0 : index
    %124 = vector.load %arg6[%123, %c0_55, %c0_56] : memref<4x8x32xf32, #tpu.memory_space<vmem>>, vector<1x8x32xf32>
    %125 = vector.shape_cast %124 : vector<1x8x32xf32> to vector<8x32xf32>
    %126 = vector.shape_cast %122 : vector<8x32xf32> to vector<1x8x32xf32>
    tpu.vector_store %arg6[%123, %c0_55, %c0_56], %126 {strides = array<i32>} : memref<4x8x32xf32, #tpu.memory_space<vmem>>, vector<1x8x32xf32>,
    %c3_i32_57 = arith.constant 3 : i32
    %127 = arith.index_cast %c3_i32_57 : i32 to index
    %c0_58 = arith.constant 0 : index
    %c0_59 = arith.constant 0 : index
    %128 = vector.load %arg9[%127, %c0_58, %c0_59] : memref<4x8x128xf32, #tpu.memory_space<vmem>>, vector<1x8x128xf32>
    %129 = vector.shape_cast %128 : vector<1x8x128xf32> to vector<8x128xf32>
    %cst_60 = arith.constant dense<0.000000e+00> : vector<8x128xf32>
    %130 = tpu.matmul %122, %4, %cst_60 {dimension_numbers = #tpu.dot_dimension_numbers<[1], [0], [0], [1], [0, 0, 1, 1], [], []>} : vector<8x32xf32>, vector<32x128xf32>, vector<8x128xf32> -> vector<8x128xf32>
    %131 = arith.addf %129, %130 : vector<8x128xf32>
    %132 = vector.extract_strided_slice %131 {offsets = [0, 0], sizes = [8, 96], strides = [1, 1]} : vector<8x128xf32> to vector<8x96xf32>
    %cst_61 = arith.constant 5.000000e-01 : f32
    %133 = vector.broadcast %cst_61 : f32 to vector<8x96xf32>
    %134 = arith.mulf %132, %133 : vector<8x96xf32>
    %135 = math.tanh %134 : vector<8x96xf32>
    %cst_62 = arith.constant 5.000000e-01 : f32
    %136 = vector.broadcast %cst_62 : f32 to vector<8x96xf32>
    %137 = arith.mulf %135, %136 : vector<8x96xf32>
    %cst_63 = arith.constant 5.000000e-01 : f32
    %138 = vector.broadcast %cst_63 : f32 to vector<8x96xf32>
    %139 = arith.addf %137, %138 : vector<8x96xf32>
    %140 = vector.extract_strided_slice %131 {offsets = [0, 96], sizes = [8, 32], strides = [1, 1]} : vector<8x128xf32> to vector<8x32xf32>
    %141 = math.tanh %140 : vector<8x32xf32>
    %142 = vector.extract_strided_slice %139 {offsets = [0, 0], sizes = [8, 32], strides = [1, 1]} : vector<8x96xf32> to vector<8x32xf32>
    %143 = vector.extract_strided_slice %139 {offsets = [0, 32], sizes = [8, 32], strides = [1, 1]} : vector<8x96xf32> to vector<8x32xf32>
    %144 = vector.extract_strided_slice %139 {offsets = [0, 64], sizes = [8, 32], strides = [1, 1]} : vector<8x96xf32> to vector<8x32xf32>
    %145 = arith.mulf %120, %143 : vector<8x32xf32>
    %146 = arith.mulf %142, %141 : vector<8x32xf32>
    %147 = arith.addf %145, %146 : vector<8x32xf32>
    %148 = math.tanh %147 : vector<8x32xf32>
    %149 = arith.mulf %144, %148 : vector<8x32xf32>
    %150 = arith.index_cast %c3_i32_57 : i32 to index
    %c0_64 = arith.constant 0 : index
    %c0_65 = arith.constant 0 : index
    %151 = vector.load %arg6[%150, %c0_64, %c0_65] : memref<4x8x32xf32, #tpu.memory_space<vmem>>, vector<1x8x32xf32>
    %152 = vector.shape_cast %151 : vector<1x8x32xf32> to vector<8x32xf32>
    %153 = vector.shape_cast %149 : vector<8x32xf32> to vector<1x8x32xf32>
    tpu.vector_store %arg6[%150, %c0_64, %c0_65], %153 {strides = array<i32>} : memref<4x8x32xf32, #tpu.memory_space<vmem>>, vector<1x8x32xf32>,
    %c4_i32_66 = arith.constant 4 : i32
    %c0_67 = arith.constant 0 : index
    %c0_68 = arith.constant 0 : index
    %154 = vector.load %arg7[%c0_67, %c0_68] : memref<8x32xf32, #tpu.memory_space<vmem>>, vector<8x32xf32>
    tpu.vector_store %arg7[%c0_67, %c0_68], %149 {strides = array<i32>} : memref<8x32xf32, #tpu.memory_space<vmem>>, vector<8x32xf32>,
    %c0_69 = arith.constant 0 : index
    %c0_70 = arith.constant 0 : index
    %155 = vector.load %arg8[%c0_69, %c0_70] : memref<8x32xf32, #tpu.memory_space<vmem>>, vector<8x32xf32>
    tpu.vector_store %arg8[%c0_69, %c0_70], %147 {strides = array<i32>} : memref<8x32xf32, #tpu.memory_space<vmem>>, vector<8x32xf32>,
    return
  }
  func.func @transform_0(%arg0: i32, %arg1: i32) -> (i32, i32, i32) {
    %c0_i32 = arith.constant 0 : i32
    %c0_i32_0 = arith.constant 0 : i32
    return %arg1, %arg0, %c0_i32 : i32, i32, i32
  }
  func.func @transform_1(%arg0: i32, %arg1: i32) -> (i32, i32) {
    %c0_i32 = arith.constant 0 : i32
    %c0_i32_0 = arith.constant 0 : i32
    %c0_i32_1 = arith.constant 0 : i32
    return %c0_i32, %c0_i32_0 : i32, i32
  }
  func.func @transform_2(%arg0: i32, %arg1: i32) -> (i32, i32) {
    %c0_i32 = arith.constant 0 : i32
    %c0_i32_0 = arith.constant 0 : i32
    %c0_i32_1 = arith.constant 0 : i32
    return %c0_i32, %c0_i32_0 : i32, i32
  }
  func.func @transform_3(%arg0: i32, %arg1: i32) -> (i32, i32) {
    %c0_i32 = arith.constant 0 : i32
    %c0_i32_0 = arith.constant 0 : i32
    %c0_i32_1 = arith.constant 0 : i32
    return %c0_i32, %c0_i32_0 : i32, i32
  }
  func.func @transform_4(%arg0: i32, %arg1: i32) -> (i32, i32, i32) {
    %c0_i32 = arith.constant 0 : i32
    %c0_i32_0 = arith.constant 0 : i32
    return %arg1, %arg0, %c0_i32 : i32, i32, i32
  }
}

</mosaic_0001>

<llo_original>
// kernel: tpu_custom_call.1
$region0: #{tpu_custom_call.1}
  #allocation0 [shape = 'u32[]', space=smem, size = 0x4, offset = 0x4, fixed_abs, tag = 'smem constant byte address 0x4 - core index']
  #allocation1 [shape = 'u32[72,128]{1,0:T(1,128)}', space=vmem, size = 0x9000, scoped, tag = 'internal scratch']
  #allocation2 [shape = 'f32[8,32]{1,0:T(8,128)}', space=vmem, size = 0x1000, scoped, tag = 'scratch operand']
  #allocation3 [shape = 'f32[8,32]{1,0:T(8,128)}', space=vmem, size = 0x1000, scoped, tag = 'scratch operand']
  #allocation4 [shape = 'f32[4,8,128]{2,1,0:T(8,128)}', space=vmem, size = 0x4000, scoped, tag = 'scratch operand']
  %s0 = inlined_call_operand.hbm [shape: f32[8,8,16], index: 0, kind: input, shape index: {}]
  %s1 = inlined_call_operand.hbm [shape: f32[16,128], index: 1, kind: input, shape index: {}]
  %s2 = inlined_call_operand.hbm [shape: f32[32,128], index: 2, kind: input, shape index: {}]
  %s3 = inlined_call_operand.vmem [shape: f32[1,128], index: 3, kind: input, shape index: {}]
  %s4 = inlined_call_operand.hbm [shape: f32[8,8,32], index: 4, kind: output, shape index: {}]
  %s5 = sld [smem:[#allocation0]]
  $region65: #{tpu_custom_call.1} parent=0
    _
  %s7 = ssub.s32 1, %s5
  %s8 = scalar_select 0, %s7, %s5
  $region1: #{tpu_custom_call.1} parent=0
    #allocation5 [shape = 'u8[32768]{0}', space=vmem, size = 0x8000, scoped, tag = 'input window, operand 0']
    #allocation6 [shape = 's32[2]{0}', space=sflag, size = 0x8, scoped, tag = 'scoped memory for tpu_custom_call.1']
    #allocation7 [shape = 's32[2]{0}', space=sflag, size = 0x8, scoped, tag = 'scoped memory for tpu_custom_call.1']
    #allocation8 [shape = 'u8[8192]{0}', space=vmem, size = 0x2000, scoped, tag = 'input window, operand 1, single buffered']
    #allocation9 [shape = 's32[1]{0}', space=sflag, size = 0x4, scoped, tag = 'scoped memory for tpu_custom_call.1']
    #allocation10 [shape = 'u8[16384]{0}', space=vmem, size = 0x4000, scoped, tag = 'input window, operand 2, single buffered']
    #allocation11 [shape = 'u8[32768]{0}', space=vmem, size = 0x8000, scoped, tag = 'output window, operand 0']
    %9 = vsyncpa [#allocation6], 0
    %s10 = scalar_lea.sflag [#allocation6], 1
    %11 = vsyncpa %s10, 0
    %12 = vsyncpa [#allocation9], 0
    %13 = vsyncpa [#allocation7], 0
    %s14 = scalar_lea.sflag [#allocation7], 1
    %15 = vsyncpa %s14, 0
    loop: start=0, step=1, limit=4
    $region2: #{tpu_custom_call.1} parent=1 // loop_pre_header
      _
    $region3: #{tpu_custom_call.1} parent=1 // loop_header
      %s17 = sphi 0, %s21
      %p18 = scmp.ge.s32.totalorder %s17, 4
      %s24 = sphi 0, %s36
      %s25 = sphi 0, %s32
      %s26 = sphi 0, %s24
      %s27 = sphi 0, %s25
      %s28 = sphi 0, %s26
      %s29 = sphi 0, %s27
      %s41 = sphi 0, %s43
      %s44 = sphi 0, %s41
      %s45 = sphi 0, %s44
      %s61 = sphi 0, %s45
      %s65 = sphi 0, %s65
      %s67 = sphi 0, %s65
      %s68 = sphi 0, %s67
      %s82 = sphi 0, %s68
      %s86 = sphi 0, %s86
      %s88 = sphi 0, %s86
      %s89 = sphi 0, %s88
      %s103 = sphi 0, %s89
      %s107 = sphi 0, %s107
      %s109 = sphi 0, %s107
      %s110 = sphi 0, %s109
      %s124 = sphi 0, %s110
      %s132 = sphi 0, %s134
      %s135 = sphi 0, %s132
      %s136 = sphi 0, %s135
      %s152 = sphi 0, %s136
    $region4: #{tpu_custom_call.1} parent=1 // loop_header_branch
      %20 = sbr.rel (%p18) target = $region8
    $region5: #{tpu_custom_call.1} parent=1 // loop_body
      %s22 = ssub.s32 %s17, 1
      %s23 = ssub.s32 %s17, 2
      %s30 = sadd.s32 1, %s25
      %p31 = scmp.ge.s32.totalorder %s30, 2
      %s32 = scalar_select %p31, 0, %s30
      %s33 = sadd.s32 1, %s24
      %s34 = scalar_select %p31, %s33, %s24
      %p35 = scmp.ge.s32.totalorder %s34, 1
      %s36 = scalar_select %p35, 0, %s34
      %s37 = ssub.s32 %s25, %s32
      %s38 = ssub.s32 %s24, %s36
      %s39 = sor.u32 %s37, %s38
      %p40 = scmp.eq.s32.totalorder %s39, 0
      %s42 = sadd.s32 %s41, 1
      %s43 = scalar_select %p40, %s41, %s42
      %p46 = pneg %p40
      %p47 = scmp.eq.s32.totalorder %s17, 1
      %p48 = por %p46, %p47
      %p49 = scmp.ne.s32.totalorder %s41, %s44
      %p50 = scmp.eq.s32.totalorder %s17, 0
      %p51 = por %p49, %p50
      %p52 = scmp.ne.s32.totalorder %s41, %s44
      %p53 = scmp.eq.s32.totalorder %s22, 1
      %p54 = por %p52, %p53
      %p55 = scmp.ne.s32.totalorder %s44, %s45
      %p56 = scmp.eq.s32.totalorder %s22, 0
      %p57 = por %p55, %p56
      %p58 = scmp.ne.s32.totalorder %s44, %s45
      %p59 = scmp.eq.s32.totalorder %s23, 1
      %p60 = por %p58, %p59
      %p62 = scmp.ne.s32.totalorder %s45, %s61
      %p63 = scmp.eq.s32.totalorder %s23, 0
      %p64 = por %p62, %p63
      %s66 = sadd.s32 %s65, 1
      %p69 = scmp.eq.s32.totalorder %s17, 1
      %p70 = scmp.ne.s32.totalorder %s65, %s67
      %p71 = scmp.eq.s32.totalorder %s17, 0
      %p72 = por %p70, %p71
      %p73 = scmp.ne.s32.totalorder %s65, %s67
      %p74 = scmp.eq.s32.totalorder %s22, 1
      %p75 = por %p73, %p74
      %p76 = scmp.ne.s32.totalorder %s67, %s68
      %p77 = scmp.eq.s32.totalorder %s22, 0
      %p78 = por %p76, %p77
      %p79 = scmp.ne.s32.totalorder %s67, %s68
      %p80 = scmp.eq.s32.totalorder %s23, 1
      %p81 = por %p79, %p80
      %p83 = scmp.ne.s32.totalorder %s68, %s82
      %p84 = scmp.eq.s32.totalorder %s23, 0
      %p85 = por %p83, %p84
      %s87 = sadd.s32 %s86, 1
      %p90 = scmp.eq.s32.totalorder %s17, 1
      %p91 = scmp.ne.s32.totalorder %s86, %s88
      %p92 = scmp.eq.s32.totalorder %s17, 0
      %p93 = por %p91, %p92
      %p94 = scmp.ne.s32.totalorder %s86, %s88
      %p95 = scmp.eq.s32.totalorder %s22, 1
      %p96 = por %p94, %p95
      %p97 = scmp.ne.s32.totalorder %s88, %s89
      %p98 = scmp.eq.s32.totalorder %s22, 0
      %p99 = por %p97, %p98
      %p100 = scmp.ne.s32.totalorder %s88, %s89
      %p101 = scmp.eq.s32.totalorder %s23, 1
      %p102 = por %p100, %p101
      %p104 = scmp.ne.s32.totalorder %s89, %s103
      %p105 = scmp.eq.s32.totalorder %s23, 0
      %p106 = por %p104, %p105
      %s108 = sadd.s32 %s107, 1
      %p111 = scmp.eq.s32.totalorder %s17, 1
      %p112 = scmp.ne.s32.totalorder %s107, %s109
      %p113 = scmp.eq.s32.totalorder %s17, 0
      %p114 = por %p112, %p113
      %p115 = scmp.ne.s32.totalorder %s107, %s109
      %p116 = scmp.eq.s32.totalorder %s22, 1
      %p117 = por %p115, %p116
      %p118 = scmp.ne.s32.totalorder %s109, %s110
      %p119 = scmp.eq.s32.totalorder %s22, 0
      %p120 = por %p118, %p119
      %p121 = scmp.ne.s32.totalorder %s109, %s110
      %p122 = scmp.eq.s32.totalorder %s23, 1
      %p123 = por %p121, %p122
      %p125 = scmp.ne.s32.totalorder %s110, %s124
      %p126 = scmp.eq.s32.totalorder %s23, 0
      %p127 = por %p125, %p126
      %s128 = ssub.s32 %s25, %s32
      %s129 = ssub.s32 %s24, %s36
      %s130 = sor.u32 %s128, %s129
      %p131 = scmp.eq.s32.totalorder %s130, 0
      %s133 = sadd.s32 %s132, 1
      %s134 = scalar_select %p131, %s132, %s133
      %p137 = pneg %p131
      %p138 = scmp.eq.s32.totalorder %s17, 1
      %p139 = por %p137, %p138
      %p140 = scmp.ne.s32.totalorder %s132, %s135
      %p141 = scmp.eq.s32.totalorder %s17, 0
      %p142 = por %p140, %p141
      %p143 = scmp.ne.s32.totalorder %s132, %s135
      %p144 = scmp.eq.s32.totalorder %s22, 1
      %p145 = por %p143, %p144
      %p146 = scmp.ne.s32.totalorder %s135, %s136
      %p147 = scmp.eq.s32.totalorder %s22, 0
      %p148 = por %p146, %p147
      %p149 = scmp.ne.s32.totalorder %s135, %s136
      %p150 = scmp.eq.s32.totalorder %s23, 1
      %p151 = por %p149, %p150
      %p153 = scmp.ne.s32.totalorder %s136, %s152
      %p154 = scmp.eq.s32.totalorder %s23, 0
      %p155 = por %p153, %p154
      %p156 = scmp.le.s32.totalorder 1, %s17
      %p157 = scmp.lt.s32.totalorder %s17, 3
      %p158 = pnand %p156, %p157
      %p159 = pneg %p158
      // Predicated region
      $region9: #{tpu_custom_call.1} parent=5 // pred_check
        _
      $region10: #{tpu_custom_call.1} parent=5 // pred_check_branch
        %161 = sbr.rel (%p158) target = $region12
      $region11: #{tpu_custom_call.1} parent=5 // pred_region
        %s162 = ssub.s32 %s17, 1
        // Predicated region
        $region13: #{tpu_custom_call.1} parent=11 // pred_check
          %p163 = pneg %p78
        $region14: #{tpu_custom_call.1} parent=11 // pred_check_branch
          %165 = sbr.rel (%p163) target = $region16
        $region15: #{tpu_custom_call.1} parent=11 // pred_region
          %167 = vsyncadd [#allocation9], 0
          %s168 = sshll.u32 %s1, 4
          %s169 = int_to_ptr.hbm [resolvable:$true] %s168
          %s170 = sshll.u32 [#allocation8], 4
          %s171 = int_to_ptr.vmem [resolvable:$true] %s170
          %176 = dma.hbm_to_vmem [thread:$0]  %s169, 256, %s171, [#allocation9], 128, 128, 8
        $region16: #{tpu_custom_call.1} parent=11 // pred_fallthru
          _
        // Predicated region
        $region17: #{tpu_custom_call.1} parent=11 // pred_check
          %p177 = pneg %p99
        $region18: #{tpu_custom_call.1} parent=11 // pred_check_branch
          %179 = sbr.rel (%p177) target = $region20
        $region19: #{tpu_custom_call.1} parent=11 // pred_region
          %181 = vsyncadd [#allocation9], 0
          %s182 = sshll.u32 %s2, 4
          %s183 = int_to_ptr.hbm [resolvable:$true] %s182
          %s184 = sshll.u32 [#allocation10], 4
          %s185 = int_to_ptr.vmem [resolvable:$true] %s184
          %190 = dma.hbm_to_vmem [thread:$0]  %s183, 512, %s185, [#allocation9], 128, 128, 8
        $region20: #{tpu_custom_call.1} parent=11 // pred_fallthru
          _
        // Predicated region
        $region21: #{tpu_custom_call.1} parent=11 // pred_check
          %p191 = pneg %p120
        $region22: #{tpu_custom_call.1} parent=11 // pred_check_branch
          %193 = sbr.rel (%p191) target = $region24
        $region23: #{tpu_custom_call.1} parent=11 // pred_region
          _
        $region24: #{tpu_custom_call.1} parent=11 // pred_fallthru
          _
      $region12: #{tpu_custom_call.1} parent=5 // pred_fallthru
        _
      %p194 = scmp.lt.s32.totalorder %s17, 2
      // Predicated region
      $region25: #{tpu_custom_call.1} parent=5 // pred_check
        %p195 = pneg %p194
      $region26: #{tpu_custom_call.1} parent=5 // pred_check_branch
        %197 = sbr.rel (%p195) target = $region28
      $region27: #{tpu_custom_call.1} parent=5 // pred_region
        // Predicated region
        $region29: #{tpu_custom_call.1} parent=27 // pred_check
          %p198 = pneg %p51
        $region30: #{tpu_custom_call.1} parent=27 // pred_check_branch
          %200 = sbr.rel (%p198) target = $region32
        $region31: #{tpu_custom_call.1} parent=27 // pred_region
          %s201 = sand.u32 %s41, 1
          %s202 = scalar_lea.sflag [#allocation6], %s201
          %s203 = sand.u32 %s41, 1
          %s204 = smul.addr %s203, 32
          %s205 = scalar_lea.vmem [#allocation5], %s204
          %s206 = smul.u32 4, %s25
          %208 = vsyncadd %s202, 0
          %s209 = sadd.s32 %s24, %s206
          %s210 = smul.addr %s209, 8
          %s211 = scalar_lea.hbm %s0, %s210
          %s212 = sshll.u32 %s211, 4
          %s213 = int_to_ptr.hbm [resolvable:$true] %s212
          %s214 = sshll.u32 %s205, 4
          %s215 = int_to_ptr.vmem [resolvable:$true] %s214
          %220 = dma.hbm_to_vmem [thread:$0]  %s213, 512, %s215, %s202, 128, 128, 8
        $region32: #{tpu_custom_call.1} parent=27 // pred_fallthru
          _
      $region28: #{tpu_custom_call.1} parent=5 // pred_fallthru
        _
      %p221 = scmp.le.s32.totalorder 1, %s17
      %p222 = scmp.lt.s32.totalorder %s17, 3
      %p223 = pnand %p221, %p222
      %p224 = pneg %p223
      // Predicated region
      $region33: #{tpu_custom_call.1} parent=5 // pred_check
        _
      $region34: #{tpu_custom_call.1} parent=5 // pred_check_branch
        %226 = sbr.rel (%p223) target = $region36
      $region35: #{tpu_custom_call.1} parent=5 // pred_region
        %s227 = ssub.s32 %s17, 1
        %s228 = sand.u32 %s44, 1
        %s229 = scalar_lea.sflag [#allocation6], %s228
        %s230 = sand.u32 %s44, 1
        %s231 = smul.addr %s230, 32
        %s232 = scalar_lea.vmem [#allocation5], %s231
        // Predicated region
        $region37: #{tpu_custom_call.1} parent=35 // pred_check
          %p233 = pneg %p57
        $region38: #{tpu_custom_call.1} parent=35 // pred_check_branch
          %235 = sbr.rel (%p233) target = $region40
        $region39: #{tpu_custom_call.1} parent=35 // pred_region
          %237 = dma.done %s229, 512
        $region40: #{tpu_custom_call.1} parent=35 // pred_fallthru
          _
        // Predicated region
        $region41: #{tpu_custom_call.1} parent=35 // pred_check
          %p238 = pneg %p78
        $region42: #{tpu_custom_call.1} parent=35 // pred_check_branch
          %240 = sbr.rel (%p238) target = $region44
        $region43: #{tpu_custom_call.1} parent=35 // pred_region
          %242 = dma.done [#allocation9], 256
        $region44: #{tpu_custom_call.1} parent=35 // pred_fallthru
          _
        // Predicated region
        $region45: #{tpu_custom_call.1} parent=35 // pred_check
          %p243 = pneg %p99
        $region46: #{tpu_custom_call.1} parent=35 // pred_check_branch
          %245 = sbr.rel (%p243) target = $region48
        $region47: #{tpu_custom_call.1} parent=35 // pred_region
          %247 = dma.done [#allocation9], 512
        $region48: #{tpu_custom_call.1} parent=35 // pred_fallthru
          _
        %s248 = sand.u32 %s44, 1
        %s249 = scalar_lea.sflag [#allocation6], %s248
        %s250 = sand.u32 %s44, 1
        %s251 = smul.addr %s250, 32
        %s252 = scalar_lea.vmem [#allocation5], %s251
        %p253 = pneg %p57
        %p254 = pneg %p54
        %p255 = pneg %p78
        %p256 = pneg %p75
        %p257 = pneg %p99
        %p258 = pneg %p96
        %p259 = pneg %p120
        %p260 = pneg %p117
        %p261 = pneg %p148
        %p262 = pneg %p145
        %s263 = sand.u32 %s135, 1
        %s264 = scalar_lea.sflag [#allocation7], %s263
        %s265 = sand.u32 %s135, 1
        %s266 = smul.addr %s265, 32
        %s267 = scalar_lea.vmem [#allocation11], %s266
        %s268 = smul.u32 4, %s27
        %s269 = smul.u32 4, %s27
        %p270 = scmp.eq.s32.totalorder %s27, 0
        // Predicated region
        $region49: #{tpu_custom_call.1} parent=35 // pred_check
          %p271 = pneg %p270
        $region50: #{tpu_custom_call.1} parent=35 // pred_check_branch
          %273 = sbr.rel (%p271) target = $region52
        $region51: #{tpu_custom_call.1} parent=35 // pred_region
          %vm274 = vcmask 261120
          %275 = vst.msk [vmem:[#allocation2] sm:$0xff] %vm274, 0.0
          %276 = vst.msk [vmem:[#allocation3] sm:$0xff] %vm274, 0.0
        $region52: #{tpu_custom_call.1} parent=35 // pred_fallthru
          _
        %v277 = vld [vmem:[#allocation8] sm:$0xff]
        %v278 = vld [vmem:[#allocation8 + $0x8] sm:$0xff]
        %v279 = vld [vmem:[#allocation10] sm:$0xff]
        %v280 = vld [vmem:[#allocation10 + $0x8] sm:$0xff]
        %v281 = vld [vmem:[#allocation10 + $0x10] sm:$0xff]
        %v282 = vld [vmem:[#allocation10 + $0x18] sm:$0xff]
        %v283 = vld [vmem:[%s3] sm:$0x1]
        %v285 = vperm.slane %v283, 0
        %v287 = vld [vmem:[%s232] sm:$0xff]
        %vm288 = vcmask 130048
        %v290 = vsel %vm288, %v287, 0
        %292 = vmatpush.msra.mxu0 0.0
        %293 = vmatpush.msra.mxu0 0.0
        %294 = vmatpush.msra.mxu0 0.0
        %295 = vmatpush.msra.mxu0 0.0
        %296 = vmatpush.msra.mxu0 0.0
        %297 = vmatpush.msra.mxu0 0.0
        %298 = vmatpush.msra.mxu0 0.0
        %299 = vmatpush.msra.mxu0 0.0
        %300 = vmatpush.msra.mxu0 0.0
        %301 = vmatpush.msra.mxu0 0.0
        %302 = vmatpush.msra.mxu0 0.0
        %303 = vmatpush.msra.mxu0 0.0
        %304 = vmatpush.msra.mxu0 0.0
        %305 = vmatpush.msra.mxu0 0.0
        %306 = vmatpush.msra.mxu0 %v278
        %307 = vmatpush.msra.mxu0 %v277
        %308 = vmatmul.f32.gmra.mxu0 %v290
        %v309 = vpop.f32.mrf.mxu0
        %v310 = vadd.f32 %v285, %v309
        %311 = vdwg.mxu0
        %312 = vst [vmem:[#allocation4] sm:$0xff] %v310
        %s313 = scalar_lea.vmem %s232, 8 [#allocation5]
        %v314 = vld [vmem:[%s313] sm:$0xff]
        %v316 = vsel %vm288, %v314, 0
        %318 = vmatpush.msra.mxu0 0.0
        %319 = vmatpush.msra.mxu0 0.0
        %320 = vmatpush.msra.mxu0 0.0
        %321 = vmatpush.msra.mxu0 0.0
        %322 = vmatpush.msra.mxu0 0.0
        %323 = vmatpush.msra.mxu0 0.0
        %324 = vmatpush.msra.mxu0 0.0
        %325 = vmatpush.msra.mxu0 0.0
        %326 = vmatpush.msra.mxu0 0.0
        %327 = vmatpush.msra.mxu0 0.0
        %328 = vmatpush.msra.mxu0 0.0
        %329 = vmatpush.msra.mxu0 0.0
        %330 = vmatpush.msra.mxu0 0.0
        %331 = vmatpush.msra.mxu0 0.0
        %332 = vmatpush.msra.mxu0 %v278
        %333 = vmatpush.msra.mxu0 %v277
        %334 = vmatmul.f32.gmra.mxu0 %v316
        %v335 = vpop.f32.mrf.mxu0
        %v336 = vadd.f32 %v285, %v335
        %337 = vdwg.mxu0
        %s338 = scalar_lea.vmem [#allocation4], 8
        %339 = vst [vmem:[%s338] sm:$0xff] %v336
        %s340 = scalar_lea.vmem %s232, 16 [#allocation5]
        %v341 = vld [vmem:[%s340] sm:$0xff]
        %v343 = vsel %vm288, %v341, 0
        %345 = vmatpush.msra.mxu0 0.0
        %346 = vmatpush.msra.mxu0 0.0
        %347 = vmatpush.msra.mxu0 0.0
        %348 = vmatpush.msra.mxu0 0.0
        %349 = vmatpush.msra.mxu0 0.0
        %350 = vmatpush.msra.mxu0 0.0
        %351 = vmatpush.msra.mxu0 0.0
        %352 = vmatpush.msra.mxu0 0.0
        %353 = vmatpush.msra.mxu0 0.0
        %354 = vmatpush.msra.mxu0 0.0
        %355 = vmatpush.msra.mxu0 0.0
        %356 = vmatpush.msra.mxu0 0.0
        %357 = vmatpush.msra.mxu0 0.0
        %358 = vmatpush.msra.mxu0 0.0
        %359 = vmatpush.msra.mxu0 %v278
        %360 = vmatpush.msra.mxu0 %v277
        %361 = vmatmul.f32.gmra.mxu0 %v343
        %v362 = vpop.f32.mrf.mxu0
        %v363 = vadd.f32 %v285, %v362
        %364 = vdwg.mxu0
        %s365 = scalar_lea.vmem [#allocation4], 16
        %366 = vst [vmem:[%s365] sm:$0xff] %v363
        %s367 = scalar_lea.vmem %s232, 24 [#allocation5]
        %v368 = vld [vmem:[%s367] sm:$0xff]
        %v370 = vsel %vm288, %v368, 0
        %372 = vmatpush.msra.mxu0 0.0
        %373 = vmatpush.msra.mxu0 0.0
        %374 = vmatpush.msra.mxu0 0.0
        %375 = vmatpush.msra.mxu0 0.0
        %376 = vmatpush.msra.mxu0 0.0
        %377 = vmatpush.msra.mxu0 0.0
        %378 = vmatpush.msra.mxu0 0.0
        %379 = vmatpush.msra.mxu0 0.0
        %380 = vmatpush.msra.mxu0 0.0
        %381 = vmatpush.msra.mxu0 0.0
        %382 = vmatpush.msra.mxu0 0.0
        %383 = vmatpush.msra.mxu0 0.0
        %384 = vmatpush.msra.mxu0 0.0
        %385 = vmatpush.msra.mxu0 0.0
        %386 = vmatpush.msra.mxu0 %v278
        %387 = vmatpush.msra.mxu0 %v277
        %388 = vmatmul.f32.gmra.mxu0 %v370
        %v389 = vpop.f32.mrf.mxu0
        %v390 = vadd.f32 %v285, %v389
        %391 = vdwg.mxu0
        %s392 = scalar_lea.vmem [#allocation4], 24
        %393 = vst [vmem:[%s392] sm:$0xff] %v390
        %v394 = vld [vmem:[#allocation2] sm:$0xff]
        %v395 = vld [vmem:[#allocation3] sm:$0xff]
        %v396 = vld [vmem:[#allocation4] sm:$0xff]
        %vm397 = vcmask 261120
        %v399 = vsel %vm397, %v394, 0
        %401 = vmatpush.msra.mxu0 0.0
        %402 = vmatpush.msra.mxu0 0.0
        %403 = vmatpush.msra.mxu0 0.0
        %404 = vmatpush.msra.mxu0 0.0
        %405 = vmatpush.msra.mxu0 0.0
        %406 = vmatpush.msra.mxu0 0.0
        %407 = vmatpush.msra.mxu0 0.0
        %408 = vmatpush.msra.mxu0 0.0
        %409 = vmatpush.msra.mxu0 0.0
        %410 = vmatpush.msra.mxu0 0.0
        %411 = vmatpush.msra.mxu0 0.0
        %412 = vmatpush.msra.mxu0 0.0
        %413 = vmatpush.msra.mxu0 %v282
        %414 = vmatpush.msra.mxu0 %v281
        %415 = vmatpush.msra.mxu0 %v280
        %416 = vmatpush.msra.mxu0 %v279
        %417 = vmatmul.f32.gmra.mxu0 %v399
        %v418 = vpop.f32.mrf.mxu0
        %v419 = vadd.f32 0.0, %v418
        %420 = vdwg.mxu0
        %v421 = vadd.f32 %v396, %v419
        %v422 = vmul.f32 %v421, 0.5
        %v423 = vtanh.pop %v422
        %v424 = vmul.f32 %v423, 0.5
        %v425 = vadd.f32 %v424, 0.5
        %v426 = vtanh.pop %v421
        %428 = vrot.lane.b32.xlu0 %v425, 96
        %v429 = vpop.permute.xlu0 %428
        %v431 = vmul.f32 %v395, %v429
        %433 = vrot.lane.b32.xlu0 %v426, 32
        %v434 = vpop.permute.xlu0 %433
        %v436 = vmul.f32 %v425, %v434
        %v437 = vadd.f32 %v431, %v436
        %v438 = vtanh.pop %v437
        %440 = vrot.lane.b32.xlu0 %v438, 64
        %v441 = vpop.permute.xlu0 %440
        %v443 = vmul.f32 %v425, %v441
        %445 = vrot.lane.b32.xlu0 %v443, 64
        %v446 = vpop.permute.xlu0 %445
        %448 = vst.msk [vmem:[%s267] sm:$0xff] %vm397, %v446
        %v449 = vld [vmem:[%s338] sm:$0xff]
        %v450 = vsel %vm397, %v446, 0
        %452 = vmatpush.msra.mxu0 0.0
        %453 = vmatpush.msra.mxu0 0.0
        %454 = vmatpush.msra.mxu0 0.0
        %455 = vmatpush.msra.mxu0 0.0
        %456 = vmatpush.msra.mxu0 0.0
        %457 = vmatpush.msra.mxu0 0.0
        %458 = vmatpush.msra.mxu0 0.0
        %459 = vmatpush.msra.mxu0 0.0
        %460 = vmatpush.msra.mxu0 0.0
        %461 = vmatpush.msra.mxu0 0.0
        %462 = vmatpush.msra.mxu0 0.0
        %463 = vmatpush.msra.mxu0 0.0
        %464 = vmatpush.msra.mxu0 %v282
        %465 = vmatpush.msra.mxu0 %v281
        %466 = vmatpush.msra.mxu0 %v280
        %467 = vmatpush.msra.mxu0 %v279
        %468 = vmatmul.f32.gmra.mxu0 %v450
        %v469 = vpop.f32.mrf.mxu0
        %v470 = vadd.f32 0.0, %v469
        %471 = vdwg.mxu0
        %v472 = vadd.f32 %v449, %v470
        %v473 = vmul.f32 %v472, 0.5
        %v474 = vtanh.pop %v473
        %v475 = vmul.f32 %v474, 0.5
        %v476 = vadd.f32 %v475, 0.5
        %v477 = vtanh.pop %v472
        %479 = vrot.lane.b32.xlu0 %v476, 96
        %v480 = vpop.permute.xlu0 %479
        %v482 = vmul.f32 %v437, %v480
        %484 = vrot.lane.b32.xlu0 %v477, 32
        %v485 = vpop.permute.xlu0 %484
        %v487 = vmul.f32 %v476, %v485
        %v488 = vadd.f32 %v482, %v487
        %v489 = vtanh.pop %v488
        %491 = vrot.lane.b32.xlu0 %v489, 64
        %v492 = vpop.permute.xlu0 %491
        %v494 = vmul.f32 %v476, %v492
        %496 = vrot.lane.b32.xlu0 %v494, 64
        %v497 = vpop.permute.xlu0 %496
        %s499 = scalar_lea.vmem %s267, 8 [#allocation11]
        %500 = vst.msk [vmem:[%s499] sm:$0xff] %vm397, %v497
        %v501 = vld [vmem:[%s365] sm:$0xff]
        %v502 = vsel %vm397, %v497, 0
        %504 = vmatpush.msra.mxu0 0.0
        %505 = vmatpush.msra.mxu0 0.0
        %506 = vmatpush.msra.mxu0 0.0
        %507 = vmatpush.msra.mxu0 0.0
        %508 = vmatpush.msra.mxu0 0.0
        %509 = vmatpush.msra.mxu0 0.0
        %510 = vmatpush.msra.mxu0 0.0
        %511 = vmatpush.msra.mxu0 0.0
        %512 = vmatpush.msra.mxu0 0.0
        %513 = vmatpush.msra.mxu0 0.0
        %514 = vmatpush.msra.mxu0 0.0
        %515 = vmatpush.msra.mxu0 0.0
        %516 = vmatpush.msra.mxu0 %v282
        %517 = vmatpush.msra.mxu0 %v281
        %518 = vmatpush.msra.mxu0 %v280
        %519 = vmatpush.msra.mxu0 %v279
        %520 = vmatmul.f32.gmra.mxu0 %v502
        %v521 = vpop.f32.mrf.mxu0
        %v522 = vadd.f32 0.0, %v521
        %523 = vdwg.mxu0
        %v524 = vadd.f32 %v501, %v522
        %v525 = vmul.f32 %v524, 0.5
        %v526 = vtanh.pop %v525
        %v527 = vmul.f32 %v526, 0.5
        %v528 = vadd.f32 %v527, 0.5
        %v529 = vtanh.pop %v524
        %531 = vrot.lane.b32.xlu0 %v528, 96
        %v532 = vpop.permute.xlu0 %531
        %v534 = vmul.f32 %v488, %v532
        %536 = vrot.lane.b32.xlu0 %v529, 32
        %v537 = vpop.permute.xlu0 %536
        %v539 = vmul.f32 %v528, %v537
        %v540 = vadd.f32 %v534, %v539
        %v541 = vtanh.pop %v540
        %543 = vrot.lane.b32.xlu0 %v541, 64
        %v544 = vpop.permute.xlu0 %543
        %v546 = vmul.f32 %v528, %v544
        %548 = vrot.lane.b32.xlu0 %v546, 64
        %v549 = vpop.permute.xlu0 %548
        %s551 = scalar_lea.vmem %s267, 16 [#allocation11]
        %552 = vst.msk [vmem:[%s551] sm:$0xff] %vm397, %v549
        %v553 = vld [vmem:[%s392] sm:$0xff]
        %v554 = vsel %vm397, %v549, 0
        %556 = vmatpush.msra.mxu0 0.0
        %557 = vmatpush.msra.mxu0 0.0
        %558 = vmatpush.msra.mxu0 0.0
        %559 = vmatpush.msra.mxu0 0.0
        %560 = vmatpush.msra.mxu0 0.0
        %561 = vmatpush.msra.mxu0 0.0
        %562 = vmatpush.msra.mxu0 0.0
        %563 = vmatpush.msra.mxu0 0.0
        %564 = vmatpush.msra.mxu0 0.0
        %565 = vmatpush.msra.mxu0 0.0
        %566 = vmatpush.msra.mxu0 0.0
        %567 = vmatpush.msra.mxu0 0.0
        %568 = vmatpush.msra.mxu0 %v282
        %569 = vmatpush.msra.mxu0 %v281
        %570 = vmatpush.msra.mxu0 %v280
        %571 = vmatpush.msra.mxu0 %v279
        %572 = vmatmul.f32.gmra.mxu0 %v554
        %v573 = vpop.f32.mrf.mxu0
        %v574 = vadd.f32 0.0, %v573
        %575 = vdwg.mxu0
        %v576 = vadd.f32 %v553, %v574
        %v577 = vmul.f32 %v576, 0.5
        %v578 = vtanh.pop %v577
        %v579 = vmul.f32 %v578, 0.5
        %v580 = vadd.f32 %v579, 0.5
        %v581 = vtanh.pop %v576
        %583 = vrot.lane.b32.xlu0 %v580, 96
        %v584 = vpop.permute.xlu0 %583
        %v586 = vmul.f32 %v540, %v584
        %588 = vrot.lane.b32.xlu0 %v581, 32
        %v589 = vpop.permute.xlu0 %588
        %v591 = vmul.f32 %v580, %v589
        %v592 = vadd.f32 %v586, %v591
        %v593 = vtanh.pop %v592
        %595 = vrot.lane.b32.xlu0 %v593, 64
        %v596 = vpop.permute.xlu0 %595
        %v598 = vmul.f32 %v580, %v596
        %600 = vrot.lane.b32.xlu0 %v598, 64
        %v601 = vpop.permute.xlu0 %600
        %s603 = scalar_lea.vmem %s267, 24 [#allocation11]
        %604 = vst.msk [vmem:[%s603] sm:$0xff] %vm397, %v601
        %605 = vst.msk [vmem:[#allocation2] sm:$0xff] %vm397, %v601
        %606 = vst.msk [vmem:[#allocation3] sm:$0xff] %vm397, %v592
        %s607 = sand.u32 %s135, 1
        %s608 = scalar_lea.sflag [#allocation7], %s607
        %s609 = sand.u32 %s135, 1
        %s610 = smul.addr %s609, 32
        %s611 = scalar_lea.vmem [#allocation11], %s610
        // Predicated region
        $region53: #{tpu_custom_call.1} parent=35 // pred_check
          %p612 = pneg %p145
        $region54: #{tpu_custom_call.1} parent=35 // pred_check_branch
          %614 = sbr.rel (%p612) target = $region56
        $region55: #{tpu_custom_call.1} parent=35 // pred_region
          %s615 = smul.u32 4, %s27
          %617 = vsyncadd %s608, 0
          %s618 = sadd.s32 %s26, %s615
          %s619 = smul.addr %s618, 8
          %s620 = scalar_lea.hbm %s4, %s619
          %s621 = sshll.u32 %s611, 4
          %s622 = int_to_ptr.vmem [resolvable:$true] %s621
          %s623 = sshll.u32 %s620, 4
          %s624 = int_to_ptr.hbm [resolvable:$true] %s623
          %629 = dma.vmem_to_hbm [thread:$0]  %s622, 512, %s624, %s608, 128, 128, 8
        $region56: #{tpu_custom_call.1} parent=35 // pred_fallthru
          _
      $region36: #{tpu_custom_call.1} parent=5 // pred_fallthru
        _
      %p630 = scmp.le.s32.totalorder 2, %s17
      // Predicated region
      $region57: #{tpu_custom_call.1} parent=5 // pred_check
        %p631 = pneg %p630
      $region58: #{tpu_custom_call.1} parent=5 // pred_check_branch
        %633 = sbr.rel (%p631) target = $region60
      $region59: #{tpu_custom_call.1} parent=5 // pred_region
        %s634 = ssub.s32 %s17, 2
        // Predicated region
        $region61: #{tpu_custom_call.1} parent=59 // pred_check
          %p635 = pneg %p151
        $region62: #{tpu_custom_call.1} parent=59 // pred_check_branch
          %637 = sbr.rel (%p635) target = $region64
        $region63: #{tpu_custom_call.1} parent=59 // pred_region
          %s638 = sand.u32 %s136, 1
          %s639 = scalar_lea.sflag [#allocation7], %s638
          %s640 = sand.u32 %s136, 1
          %s641 = smul.addr %s640, 32
          %s642 = scalar_lea.vmem [#allocation11], %s641
          %644 = dma.done %s639, 512
        $region64: #{tpu_custom_call.1} parent=59 // pred_fallthru
          _
      $region60: #{tpu_custom_call.1} parent=5 // pred_fallthru
        _
    $region6: #{tpu_custom_call.1} parent=1 // loop_footer
      %s21 = sadd.s32 1, %s17
    $region7: #{tpu_custom_call.1} parent=1 // loop_footer_branch
      %16 = sbr.rel target = $region3
    $region8: #{tpu_custom_call.1} parent=1 // loop_exit
      _
    %645 = vsyncpa [#allocation6], 1
    %s646 = scalar_lea.sflag [#allocation6], 1
    %647 = vsyncpa %s646, 1
    %648 = vsyncpa [#allocation9], 1
    %649 = vsyncpa [#allocation7], 1
    %s650 = scalar_lea.sflag [#allocation7], 1
    %651 = vsyncpa %s650, 1

</llo_original>
